<compile_context>
chip_gen: v6e
topology: v6e:2x2x1
jax: 0.10.0
libtpu: 0.0.40
codegen_flags: <defaults>
</compile_context>

<pallas_src>
import functools

import jax
import jax.numpy as jnp
from jax.experimental import pallas as pl
from jax.experimental.pallas import tpu as pltpu

# Per-batch [C, H*W] slab (f32 bytes) must stay below this for the fused path.
_FUSED_BLOCK_F32_LIMIT = 4 << 20     # 4 MiB  (covers all standard ResNet SE uses)
# Per-block x budget for the two-pass fallback's spatial tiling.
_FALLBACK_BLOCK_BUDGET = 4 << 20     # 4 MiB
# Scoped-VMEM request; leaves headroom on v5e/v6e (128 MiB) and v7x (64 MiB).
_VMEM_LIMIT_BYTES = 40 << 20


# ----------------------------------------------------------------------------
# Shared excitation epilogue: mean [B?, C] -> sigmoid(fc2(prelu(fc1(mean))))
# ----------------------------------------------------------------------------
def _gate_from_mean(mean, w1_ref, b1_ref, a_ref, w2_ref, b2_ref):
    h = jnp.dot(mean, w1_ref[...], preferred_element_type=jnp.float32) + b1_ref[...]
    # nn.PReLU() default: one learnable slope shared across channels.
    h = jnp.maximum(h, 0.0) + a_ref[...] * jnp.minimum(h, 0.0)
    z = jnp.dot(h, w2_ref[...], preferred_element_type=jnp.float32) + b2_ref[...]
    return 1.0 / (1.0 + jnp.exp(-z))


# ----------------------------------------------------------------------------
# Fused kernel: pool + FC/PReLU/FC/sigmoid + rescale, one batch per grid step
# ----------------------------------------------------------------------------
def _fused_kernel(x_ref, w1_ref, b1_ref, a_ref, w2_ref, b2_ref, o_ref, *, inv_hw):
    x = x_ref[...].astype(jnp.float32)                       # [1, C, HW]
    mean = jnp.sum(x, axis=-1) * inv_hw                      # [1, C]
    gate = _gate_from_mean(mean, w1_ref, b1_ref, a_ref, w2_ref, b2_ref)
    o_ref[...] = (x * gate[:, :, None]).astype(o_ref.dtype)


def _fused_pallas(x, params, in_place):
    b, c, hw = x.shape
    cr = params["fc1_w"].shape[1]
    itemsize = x.dtype.itemsize
    kern = functools.partial(_fused_kernel, inv_hw=1.0 / float(hw))
    grid_spec = pltpu.PrefetchScalarGridSpec(
        num_scalar_prefetch=0,
        grid=(b,),
        in_specs=[
            pl.BlockSpec((1, c, hw), lambda i: (i, 0, 0)),   # x, per-batch slab
            pl.BlockSpec((c, cr), lambda i: (0, 0)),         # fc1 weight
            pl.BlockSpec((1, cr), lambda i: (0, 0)),         # fc1 bias
            pl.BlockSpec((1, 1), lambda i: (0, 0)),          # PReLU slope
            pl.BlockSpec((cr, c), lambda i: (0, 0)),         # fc2 weight
            pl.BlockSpec((1, c), lambda i: (0, 0)),          # fc2 bias
        ],
        out_specs=pl.BlockSpec((1, c, hw), lambda i: (i, 0, 0)),
    )
    cost = pl.CostEstimate(
        flops=2 * b * c * hw + 4 * b * c * cr,
        transcendentals=b * c,
        bytes_accessed=2 * b * c * hw * itemsize + 2 * c * cr * 4,
    )
    return pl.pallas_call(
        kern,
        out_shape=jax.ShapeDtypeStruct((b, c, hw), x.dtype),
        grid_spec=grid_spec,
        compiler_params=pltpu.CompilerParams(
            dimension_semantics=("parallel",),               # v7x: 2 TCs split B
            vmem_limit_bytes=_VMEM_LIMIT_BYTES),
        cost_estimate=cost,
        input_output_aliases=({0: 0} if in_place else {}),
    )(x, params["fc1_w"], params["fc1_b"], params["prelu_a"],
      params["fc2_w"], params["fc2_b"])


# ----------------------------------------------------------------------------
# Fallback kernel 1: pool over spatial tiles (+ FC epilogue on the last tile)
# ----------------------------------------------------------------------------
def _pool_fc_kernel(x_ref, w1_ref, b1_ref, a_ref, w2_ref, b2_ref,
                    gate_ref, acc_ref, *, inv_hw):
    step = pl.program_id(1)

    @pl.when(step == 0)
    def _init():
        acc_ref[...] = jnp.zeros_like(acc_ref)

    acc_ref[...] += jnp.sum(x_ref[...].astype(jnp.float32), axis=-1)

    @pl.when(step == pl.num_programs(1) - 1)
    def _finalize():
        mean = acc_ref[...] * inv_hw
        gate_ref[...] = _gate_from_mean(mean, w1_ref, b1_ref, a_ref, w2_ref, b2_ref)


def _pool_fc_pallas(x, params, thw, true_hw):
    b, c, hw = x.shape
    cr = params["fc1_w"].shape[1]
    n_tiles = hw // thw
    itemsize = x.dtype.itemsize
    kern = functools.partial(_pool_fc_kernel, inv_hw=1.0 / float(true_hw))
    grid_spec = pltpu.PrefetchScalarGridSpec(
        num_scalar_prefetch=0,
        grid=(b, n_tiles),
        in_specs=[
            pl.BlockSpec((1, c, thw), lambda i, s: (i, 0, s)),
            pl.BlockSpec((c, cr), lambda i, s: (0, 0)),
            pl.BlockSpec((1, cr), lambda i, s: (0, 0)),
            pl.BlockSpec((1, 1), lambda i, s: (0, 0)),
            pl.BlockSpec((cr, c), lambda i, s: (0, 0)),
            pl.BlockSpec((1, c), lambda i, s: (0, 0)),
        ],
        out_specs=pl.BlockSpec((1, c), lambda i, s: (i, 0)),
        scratch_shapes=[pltpu.VMEM((1, c), jnp.float32)],
    )
    cost = pl.CostEstimate(
        flops=b * c * hw + 4 * b * c * cr,
        transcendentals=b * c,
        bytes_accessed=b * c * hw * itemsize + 2 * c * cr * 4 + b * c * 4,
    )
    return pl.pallas_call(
        kern,
        out_shape=jax.ShapeDtypeStruct((b, c), jnp.float32),
        grid_spec=grid_spec,
        compiler_params=pltpu.CompilerParams(
            dimension_semantics=("parallel", "arbitrary"),
            vmem_limit_bytes=_VMEM_LIMIT_BYTES),
        cost_estimate=cost,
    )(x, params["fc1_w"], params["fc1_b"], params["prelu_a"],
      params["fc2_w"], params["fc2_b"])


# ----------------------------------------------------------------------------
# Fallback kernel 2: out = x * gate[:, :, None]
# ----------------------------------------------------------------------------
def _scale_kernel(x_ref, g_ref, o_ref):
    g = g_ref[...]                                           # [1, C] f32 gate
    o_ref[...] = (x_ref[...].astype(jnp.float32) * g[:, :, None]).astype(o_ref.dtype)


def _scale_pallas(x, gate, thw):
    b, c, hw = x.shape
    n_tiles = hw // thw
    itemsize = x.dtype.itemsize
    cost = pl.CostEstimate(
        flops=b * c * hw,
        transcendentals=0,
        bytes_accessed=2 * b * c * hw * itemsize + b * c * 4,
    )
    return pl.pallas_call(
        _scale_kernel,
        out_shape=jax.ShapeDtypeStruct((b, c, hw), x.dtype),
        grid_spec=pltpu.PrefetchScalarGridSpec(
            num_scalar_prefetch=0,
            grid=(b, n_tiles),
            in_specs=[
                pl.BlockSpec((1, c, thw), lambda i, s: (i, 0, s)),
                pl.BlockSpec((1, c), lambda i, s: (i, 0)),
            ],
            out_specs=pl.BlockSpec((1, c, thw), lambda i, s: (i, 0, s)),
        ),
        compiler_params=pltpu.CompilerParams(
            dimension_semantics=("parallel", "parallel"),
            vmem_limit_bytes=_VMEM_LIMIT_BYTES),
        cost_estimate=cost,
    )(x, gate)


# ----------------------------------------------------------------------------
# Wrappers
# ----------------------------------------------------------------------------
def _pick_spatial_tile(hw_padded, c, itemsize, budget_bytes=_FALLBACK_BLOCK_BUDGET):
    """Largest multiple of 128 dividing hw_padded whose [C, tile] block fits."""
    assert hw_padded % 128 == 0
    best = 128
    for t in range(128, hw_padded + 1, 128):
        if hw_padded % t == 0 and c * t * itemsize <= budget_bytes:
            best = t
    return best


def se_block_forward(params, x_nchw, *, in_place=False, force_two_pass=False,
                     spatial_tile=None):
    """SEBlock forward: x [B, C, H, W] -> x * sigmoid(fc(avgpool(x)))."""
    b, c, h, w = x_nchw.shape
    hw = h * w
    x = x_nchw.reshape(b, c, hw)

    if (c * hw * 4 <= _FUSED_BLOCK_F32_LIMIT) and not force_two_pass:
        # Fully fused single pass: 2x HBM traffic (read x + write out).
        out = _fused_pallas(x, params, in_place)
        return out.reshape(b, c, h, w)

    # Two-pass fallback for very large per-batch feature maps.  Pad H*W up to
    # a lane-dense multiple of 128 (padded zeros don't change the pooled sum;
    # we divide by the true H*W) and stream spatial tiles.
    hw_pad = ((hw + 127) // 128) * 128
    xp = x if hw_pad == hw else jnp.pad(x, ((0, 0), (0, 0), (0, hw_pad - hw)))
    if spatial_tile is None:
        spatial_tile = _pick_spatial_tile(hw_pad, c, x.dtype.itemsize)
    assert hw_pad % spatial_tile == 0, (hw_pad, spatial_tile)
    gate = _pool_fc_pallas(xp, params, spatial_tile, hw)     # [B, C] f32
    outp = _scale_pallas(xp, gate, spatial_tile)             # [B, C, HW_pad]
    out = outp if hw_pad == hw else outp[:, :, :hw]
    return out.reshape(b, c, h, w)


# ----------------------------------------------------------------------------
# Parameters (deterministic, in-script) and pure-JAX reference
# ----------------------------------------------------------------------------
def init_params(key, channel, reduction=16):
    cr = max(1, channel // reduction)
    k1, k2, k3, k4 = jax.random.split(key, 4)
    lim1 = 1.0 / (channel ** 0.5)
    lim2 = 1.0 / (cr ** 0.5)
    return {
        # Stored pre-transposed for y @ W: fc1_w [C, Cr], fc2_w [Cr, C].
        "fc1_w": jax.random.uniform(k1, (channel, cr), jnp.float32, -lim1, lim1),
        "fc1_b": jax.random.uniform(k2, (1, cr), jnp.float32, -lim1, lim1),
        "prelu_a": jnp.full((1, 1), 0.25, jnp.float32),  # nn.PReLU() default init
        "fc2_w": jax.random.uniform(k3, (cr, channel), jnp.float32, -lim2, lim2),
        "fc2_b": jax.random.uniform(k4, (1, channel), jnp.float32, -lim2, lim2),
    }


def se_block_ref(params, x):
    y = jnp.mean(x, axis=(2, 3))                                 # [B, C]
    h = y @ params["fc1_w"] + params["fc1_b"]                    # [B, Cr]
    h = jnp.maximum(h, 0.0) + params["prelu_a"] * jnp.minimum(h, 0.0)
    g = jax.nn.sigmoid(h @ params["fc2_w"] + params["fc2_b"])    # [B, C]
    return x * g[:, :, None, None]


if __name__ == "__main__":
    key = jax.random.PRNGKey(0)
    channel, reduction = 64, 16   # reduction=16 (module default) => C >= 16
    kp, kx1, kx2, kx3 = jax.random.split(key, 4)
    params = init_params(kp, channel, reduction)

    # Case 1: fused single-kernel path, f32, B=2, C=64, 16x16.
    x1 = jax.random.normal(kx1, (2, channel, 16, 16), jnp.float32)
    out1 = jax.block_until_ready(se_block_forward(params, x1))
    ref1 = se_block_ref(params, x1)
    assert out1.shape == x1.shape, out1.shape
    assert bool(jnp.all(jnp.isfinite(out1)))
    assert bool(jnp.allclose(out1, ref1, rtol=1e-4, atol=1e-5)), \
        float(jnp.max(jnp.abs(out1 - ref1)))

    # Case 2: fused path with native bf16 activations (halved HBM traffic).
    x2 = jax.random.normal(kx2, (2, channel, 32, 32), jnp.bfloat16)
    out2 = jax.block_until_ready(se_block_forward(params, x2))
    ref2 = se_block_ref(params, x2.astype(jnp.float32))
    assert out2.dtype == jnp.bfloat16
    assert bool(jnp.allclose(out2.astype(jnp.float32), ref2, rtol=2e-2, atol=2e-2))

    # Case 3: forced two-pass fallback on a non-128-multiple spatial size
    # (14x14 -> padded to 256, tiled at 128): exercises padding, the f32
    # accumulator and the pl.when init/finalize path.
    x3 = jax.random.normal(kx3, (2, channel, 14, 14), jnp.float32)
    out3 = jax.block_until_ready(
        se_block_forward(params, x3, force_two_pass=True, spatial_tile=128))
    ref3 = se_block_ref(params, x3)
    assert bool(jnp.allclose(out3, ref3, rtol=1e-4, atol=1e-5)), \
        float(jnp.max(jnp.abs(out3 - ref3)))

    print("KERNEL_OK")
</pallas_src>

<mosaic_0001>
module attributes {stable_mosaic.version = 11 : i64} {
  func.func @_fused_kernel(%arg0: i32, %arg1: memref<1x64x256xf32, #tpu.memory_space<vmem>>, %arg2: memref<64x4xf32, #tpu.memory_space<vmem>>, %arg3: memref<1x4xf32, #tpu.memory_space<vmem>>, %arg4: memref<1x1xf32, #tpu.memory_space<vmem>>, %arg5: memref<4x64xf32, #tpu.memory_space<vmem>>, %arg6: memref<1x64xf32, #tpu.memory_space<vmem>>, %arg7: memref<1x64x256xf32, #tpu.memory_space<vmem>>) attributes {dimension_semantics = [#tpu.dimension_semantics<parallel>], iteration_bounds = array<i64: 2>, scalar_prefetch = 0 : i64, scratch_operands = 0 : i64, tpu.core_type = #tpu.core_type<tc>, window_params = [{transform_indices = @transform_0, window_bounds = array<i64: 1, 64, 256>}, {pipeline_mode = #tpu.pipeline_mode<synchronous>, transform_indices = @transform_1, window_bounds = array<i64: 64, 4>}, {pipeline_mode = #tpu.pipeline_mode<synchronous>, transform_indices = @transform_2, window_bounds = array<i64: 1, 4>}, {pipeline_mode = #tpu.pipeline_mode<synchronous>, transform_indices = @transform_3, window_bounds = array<i64: 1, 1>}, {pipeline_mode = #tpu.pipeline_mode<synchronous>, transform_indices = @transform_4, window_bounds = array<i64: 4, 64>}, {pipeline_mode = #tpu.pipeline_mode<synchronous>, transform_indices = @transform_5, window_bounds = array<i64: 1, 64>}, {transform_indices = @transform_6, window_bounds = array<i64: 1, 64, 256>}]} {
    %c0 = arith.constant 0 : index
    %c0_0 = arith.constant 0 : index
    %c0_1 = arith.constant 0 : index
    %0 = vector.load %arg1[%c0, %c0_0, %c0_1] : memref<1x64x256xf32, #tpu.memory_space<vmem>>, vector<1x64x256xf32>
    %cst = arith.constant dense<0.000000e+00> : vector<1x64xf32>
    %1 = vector.multi_reduction <add>, %0, %cst [2] : vector<1x64x256xf32> to vector<1x64xf32>
    %cst_2 = arith.constant 3.906250e-03 : f32
    %2 = vector.broadcast %cst_2 : f32 to vector<1x64xf32>
    %3 = arith.mulf %1, %2 : vector<1x64xf32>
    %c0_3 = arith.constant 0 : index
    %c0_4 = arith.constant 0 : index
    %4 = vector.load %arg2[%c0_3, %c0_4] : memref<64x4xf32, #tpu.memory_space<vmem>>, vector<64x4xf32>
    %cst_5 = arith.constant dense<0.000000e+00> : vector<1x4xf32>
    %5 = tpu.matmul %3, %4, %cst_5 {dimension_numbers = #tpu.dot_dimension_numbers<[1], [0], [0], [1], [0, 0, 1, 1], [], []>} : vector<1x64xf32>, vector<64x4xf32>, vector<1x4xf32> -> vector<1x4xf32>
    %c0_6 = arith.constant 0 : index
    %c0_7 = arith.constant 0 : index
    %6 = vector.load %arg3[%c0_6, %c0_7] : memref<1x4xf32, #tpu.memory_space<vmem>>, vector<1x4xf32>
    %7 = arith.addf %5, %6 : vector<1x4xf32>
    %cst_8 = arith.constant 0.000000e+00 : f32
    %8 = vector.broadcast %cst_8 : f32 to vector<1x4xf32>
    %9 = arith.maximumf %7, %8 : vector<1x4xf32>
    %c0_9 = arith.constant 0 : index
    %c0_10 = arith.constant 0 : index
    %10 = vector.load %arg4[%c0_9, %c0_10] : memref<1x1xf32, #tpu.memory_space<vmem>>, vector<1x1xf32>
    %cst_11 = arith.constant 0.000000e+00 : f32
    %11 = vector.broadcast %cst_11 : f32 to vector<1x4xf32>
    %12 = arith.minimumf %7, %11 : vector<1x4xf32>
    %13 = vector.broadcast %10 : vector<1x1xf32> to vector<1x4xf32>
    %14 = arith.mulf %13, %12 : vector<1x4xf32>
    %15 = arith.addf %9, %14 : vector<1x4xf32>
    %c0_12 = arith.constant 0 : index
    %c0_13 = arith.constant 0 : index
    %16 = vector.load %arg5[%c0_12, %c0_13] : memref<4x64xf32, #tpu.memory_space<vmem>>, vector<4x64xf32>
    %cst_14 = arith.constant dense<0.000000e+00> : vector<1x64xf32>
    %17 = tpu.matmul %15, %16, %cst_14 {dimension_numbers = #tpu.dot_dimension_numbers<[1], [0], [0], [1], [0, 0, 1, 1], [], []>} : vector<1x4xf32>, vector<4x64xf32>, vector<1x64xf32> -> vector<1x64xf32>
    %c0_15 = arith.constant 0 : index
    %c0_16 = arith.constant 0 : index
    %18 = vector.load %arg6[%c0_15, %c0_16] : memref<1x64xf32, #tpu.memory_space<vmem>>, vector<1x64xf32>
    %19 = arith.addf %17, %18 : vector<1x64xf32>
    %cst_17 = arith.constant 0.000000e+00 : f32
    %20 = vector.broadcast %cst_17 : f32 to vector<1x64xf32>
    %21 = arith.subf %20, %19 : vector<1x64xf32>
    %22 = math.exp %21 : vector<1x64xf32>
    %cst_18 = arith.constant 1.000000e+00 : f32
    %23 = vector.broadcast %cst_18 : f32 to vector<1x64xf32>
    %24 = arith.addf %23, %22 : vector<1x64xf32>
    %cst_19 = arith.constant 1.000000e+00 : f32
    %25 = vector.broadcast %cst_19 : f32 to vector<1x64xf32>
    %26 = arith.divf %25, %24 : vector<1x64xf32>
    %27 = vector.shape_cast %26 : vector<1x64xf32> to vector<1x64x1xf32>
    %28 = vector.broadcast %27 : vector<1x64x1xf32> to vector<1x64x256xf32>
    %29 = arith.mulf %0, %28 : vector<1x64x256xf32>
    %c0_20 = arith.constant 0 : index
    %c0_21 = arith.constant 0 : index
    %c0_22 = arith.constant 0 : index
    %30 = vector.load %arg7[%c0_20, %c0_21, %c0_22] : memref<1x64x256xf32, #tpu.memory_space<vmem>>, vector<1x64x256xf32>
    tpu.vector_store %arg7[%c0_20, %c0_21, %c0_22], %29 {strides = array<i32>} : memref<1x64x256xf32, #tpu.memory_space<vmem>>, vector<1x64x256xf32>,
    return
  }
  func.func @transform_0(%arg0: i32) -> (i32, i32, i32) {
    %c0_i32 = arith.constant 0 : i32
    %c0_i32_0 = arith.constant 0 : i32
    %c0_i32_1 = arith.constant 0 : i32
    return %arg0, %c0_i32, %c0_i32_0 : i32, i32, i32
  }
  func.func @transform_1(%arg0: i32) -> (i32, i32) {
    %c0_i32 = arith.constant 0 : i32
    %c0_i32_0 = arith.constant 0 : i32
    %c0_i32_1 = arith.constant 0 : i32
    return %c0_i32, %c0_i32_0 : i32, i32
  }
  func.func @transform_2(%arg0: i32) -> (i32, i32) {
    %c0_i32 = arith.constant 0 : i32
    %c0_i32_0 = arith.constant 0 : i32
    %c0_i32_1 = arith.constant 0 : i32
    return %c0_i32, %c0_i32_0 : i32, i32
  }
  func.func @transform_3(%arg0: i32) -> (i32, i32) {
    %c0_i32 = arith.constant 0 : i32
    %c0_i32_0 = arith.constant 0 : i32
    %c0_i32_1 = arith.constant 0 : i32
    return %c0_i32, %c0_i32_0 : i32, i32
  }
  func.func @transform_4(%arg0: i32) -> (i32, i32) {
    %c0_i32 = arith.constant 0 : i32
    %c0_i32_0 = arith.constant 0 : i32
    %c0_i32_1 = arith.constant 0 : i32
    return %c0_i32, %c0_i32_0 : i32, i32
  }
  func.func @transform_5(%arg0: i32) -> (i32, i32) {
    %c0_i32 = arith.constant 0 : i32
    %c0_i32_0 = arith.constant 0 : i32
    %c0_i32_1 = arith.constant 0 : i32
    return %c0_i32, %c0_i32_0 : i32, i32
  }
  func.func @transform_6(%arg0: i32) -> (i32, i32, i32) {
    %c0_i32 = arith.constant 0 : i32
    %c0_i32_0 = arith.constant 0 : i32
    %c0_i32_1 = arith.constant 0 : i32
    return %arg0, %c0_i32, %c0_i32_0 : i32, i32, i32
  }
}

</mosaic_0001>

<llo_original>
// kernel: tpu_custom_call.1
$region0: #{tpu_custom_call.1}
  #allocation0 [shape = 'u32[]', space=smem, size = 0x4, offset = 0x4, fixed_abs, tag = 'smem constant byte address 0x4 - core index']
  #allocation1 [shape = 'u32[144,128]{1,0:T(1,128)}', space=vmem, size = 0x12000, scoped, tag = 'internal scratch']
  #allocation2 [shape = 'f32[1,1]{1,0:T(1,128)S(1)}', space=vmem, size = 0x200, scoped, tag = 'scoped memory for tpu_custom_call.1']
  %s0 = inlined_call_operand.hbm [shape: f32[2,64,256], index: 0, kind: input, shape index: {}]
  %s1 = inlined_call_operand.vmem [shape: f32[64,4], index: 1, kind: input, shape index: {}]
  %s2 = inlined_call_operand.vmem [shape: f32[1,4], index: 2, kind: input, shape index: {}]
  %s3 = inlined_call_operand.<no memory space> [shape: f32[1,1], index: 3, kind: input, shape index: {}]
  %s4 = inlined_call_operand.vmem [shape: f32[4,64], index: 4, kind: input, shape index: {}]
  %s5 = inlined_call_operand.vmem [shape: f32[1,64], index: 5, kind: input, shape index: {}]
  %s6 = inlined_call_operand.hbm [shape: f32[2,64,256], index: 6, kind: output, shape index: {}]
  %s7 = sld [smem:[#allocation0]]
  $region61: #{tpu_custom_call.1} parent=0
    _
  %s9 = ssub.s32 1, %s7
  %s10 = scalar_select 0, %s9, %s7
  %v11 = vstv %s3
  %12 = vst [vmem:[#allocation2] sm:$0x1] %v11
  $region1: #{tpu_custom_call.1} parent=0
    #allocation3 [shape = 'u8[131072]{0}', space=vmem, size = 0x20000, scoped, tag = 'input window, operand 0']
    #allocation4 [shape = 's32[2]{0}', space=sflag, size = 0x8, scoped, tag = 'scoped memory for tpu_custom_call.1']
    #allocation5 [shape = 's32[2]{0}', space=sflag, size = 0x8, scoped, tag = 'scoped memory for tpu_custom_call.1']
    #allocation6 [shape = 'u8[131072]{0}', space=vmem, size = 0x20000, scoped, tag = 'output window, operand 0']
    %13 = vsyncpa [#allocation4], 0
    %s14 = scalar_lea.sflag [#allocation4], 1
    %15 = vsyncpa %s14, 0
    %16 = vsyncpa [#allocation5], 0
    %s17 = scalar_lea.sflag [#allocation5], 1
    %18 = vsyncpa %s17, 0
    loop: start=0, step=1, limit=4
    $region2: #{tpu_custom_call.1} parent=1 // loop_pre_header
      _
    $region3: #{tpu_custom_call.1} parent=1 // loop_header
      %s20 = sphi 0, %s24
      %p21 = scmp.ge.s32.totalorder %s20, 4
      %s30 = sphi 0, %s32
      %s33 = sphi 0, %s30
      %s34 = sphi 0, %s33
      %s50 = sphi 0, %s34
      %s54 = sphi 0, %s54
      %s56 = sphi 0, %s54
      %s57 = sphi 0, %s56
      %s71 = sphi 0, %s57
      %s75 = sphi 0, %s75
      %s77 = sphi 0, %s75
      %s78 = sphi 0, %s77
      %s92 = sphi 0, %s78
      %s96 = sphi 0, %s96
      %s98 = sphi 0, %s96
      %s99 = sphi 0, %s98
      %s113 = sphi 0, %s99
      %s117 = sphi 0, %s117
      %s119 = sphi 0, %s117
      %s120 = sphi 0, %s119
      %s134 = sphi 0, %s120
      %s138 = sphi 0, %s138
      %s140 = sphi 0, %s138
      %s141 = sphi 0, %s140
      %s155 = sphi 0, %s141
      %s161 = sphi 0, %s163
      %s164 = sphi 0, %s161
      %s165 = sphi 0, %s164
      %s181 = sphi 0, %s165
    $region4: #{tpu_custom_call.1} parent=1 // loop_header_branch
      %23 = sbr.rel (%p21) target = $region8
    $region5: #{tpu_custom_call.1} parent=1 // loop_body
      %s25 = ssub.s32 %s20, 1
      %s26 = ssub.s32 %s20, 2
      %s27 = sadd.s32 %s20, 1
      %s28 = ssub.s32 %s20, %s27
      %p29 = scmp.eq.s32.totalorder %s28, 0
      %s31 = sadd.s32 %s30, 1
      %s32 = scalar_select %p29, %s30, %s31
      %p35 = pneg %p29
      %p36 = scmp.eq.s32.totalorder %s20, 1
      %p37 = por %p35, %p36
      %p38 = scmp.ne.s32.totalorder %s30, %s33
      %p39 = scmp.eq.s32.totalorder %s20, 0
      %p40 = por %p38, %p39
      %p41 = scmp.ne.s32.totalorder %s30, %s33
      %p42 = scmp.eq.s32.totalorder %s25, 1
      %p43 = por %p41, %p42
      %p44 = scmp.ne.s32.totalorder %s33, %s34
      %p45 = scmp.eq.s32.totalorder %s25, 0
      %p46 = por %p44, %p45
      %p47 = scmp.ne.s32.totalorder %s33, %s34
      %p48 = scmp.eq.s32.totalorder %s26, 1
      %p49 = por %p47, %p48
      %p51 = scmp.ne.s32.totalorder %s34, %s50
      %p52 = scmp.eq.s32.totalorder %s26, 0
      %p53 = por %p51, %p52
      %s55 = sadd.s32 %s54, 1
      %p58 = scmp.eq.s32.totalorder %s20, 1
      %p59 = scmp.ne.s32.totalorder %s54, %s56
      %p60 = scmp.eq.s32.totalorder %s20, 0
      %p61 = por %p59, %p60
      %p62 = scmp.ne.s32.totalorder %s54, %s56
      %p63 = scmp.eq.s32.totalorder %s25, 1
      %p64 = por %p62, %p63
      %p65 = scmp.ne.s32.totalorder %s56, %s57
      %p66 = scmp.eq.s32.totalorder %s25, 0
      %p67 = por %p65, %p66
      %p68 = scmp.ne.s32.totalorder %s56, %s57
      %p69 = scmp.eq.s32.totalorder %s26, 1
      %p70 = por %p68, %p69
      %p72 = scmp.ne.s32.totalorder %s57, %s71
      %p73 = scmp.eq.s32.totalorder %s26, 0
      %p74 = por %p72, %p73
      %s76 = sadd.s32 %s75, 1
      %p79 = scmp.eq.s32.totalorder %s20, 1
      %p80 = scmp.ne.s32.totalorder %s75, %s77
      %p81 = scmp.eq.s32.totalorder %s20, 0
      %p82 = por %p80, %p81
      %p83 = scmp.ne.s32.totalorder %s75, %s77
      %p84 = scmp.eq.s32.totalorder %s25, 1
      %p85 = por %p83, %p84
      %p86 = scmp.ne.s32.totalorder %s77, %s78
      %p87 = scmp.eq.s32.totalorder %s25, 0
      %p88 = por %p86, %p87
      %p89 = scmp.ne.s32.totalorder %s77, %s78
      %p90 = scmp.eq.s32.totalorder %s26, 1
      %p91 = por %p89, %p90
      %p93 = scmp.ne.s32.totalorder %s78, %s92
      %p94 = scmp.eq.s32.totalorder %s26, 0
      %p95 = por %p93, %p94
      %s97 = sadd.s32 %s96, 1
      %p100 = scmp.eq.s32.totalorder %s20, 1
      %p101 = scmp.ne.s32.totalorder %s96, %s98
      %p102 = scmp.eq.s32.totalorder %s20, 0
      %p103 = por %p101, %p102
      %p104 = scmp.ne.s32.totalorder %s96, %s98
      %p105 = scmp.eq.s32.totalorder %s25, 1
      %p106 = por %p104, %p105
      %p107 = scmp.ne.s32.totalorder %s98, %s99
      %p108 = scmp.eq.s32.totalorder %s25, 0
      %p109 = por %p107, %p108
      %p110 = scmp.ne.s32.totalorder %s98, %s99
      %p111 = scmp.eq.s32.totalorder %s26, 1
      %p112 = por %p110, %p111
      %p114 = scmp.ne.s32.totalorder %s99, %s113
      %p115 = scmp.eq.s32.totalorder %s26, 0
      %p116 = por %p114, %p115
      %s118 = sadd.s32 %s117, 1
      %p121 = scmp.eq.s32.totalorder %s20, 1
      %p122 = scmp.ne.s32.totalorder %s117, %s119
      %p123 = scmp.eq.s32.totalorder %s20, 0
      %p124 = por %p122, %p123
      %p125 = scmp.ne.s32.totalorder %s117, %s119
      %p126 = scmp.eq.s32.totalorder %s25, 1
      %p127 = por %p125, %p126
      %p128 = scmp.ne.s32.totalorder %s119, %s120
      %p129 = scmp.eq.s32.totalorder %s25, 0
      %p130 = por %p128, %p129
      %p131 = scmp.ne.s32.totalorder %s119, %s120
      %p132 = scmp.eq.s32.totalorder %s26, 1
      %p133 = por %p131, %p132
      %p135 = scmp.ne.s32.totalorder %s120, %s134
      %p136 = scmp.eq.s32.totalorder %s26, 0
      %p137 = por %p135, %p136
      %s139 = sadd.s32 %s138, 1
      %p142 = scmp.eq.s32.totalorder %s20, 1
      %p143 = scmp.ne.s32.totalorder %s138, %s140
      %p144 = scmp.eq.s32.totalorder %s20, 0
      %p145 = por %p143, %p144
      %p146 = scmp.ne.s32.totalorder %s138, %s140
      %p147 = scmp.eq.s32.totalorder %s25, 1
      %p148 = por %p146, %p147
      %p149 = scmp.ne.s32.totalorder %s140, %s141
      %p150 = scmp.eq.s32.totalorder %s25, 0
      %p151 = por %p149, %p150
      %p152 = scmp.ne.s32.totalorder %s140, %s141
      %p153 = scmp.eq.s32.totalorder %s26, 1
      %p154 = por %p152, %p153
      %p156 = scmp.ne.s32.totalorder %s141, %s155
      %p157 = scmp.eq.s32.totalorder %s26, 0
      %p158 = por %p156, %p157
      %s159 = ssub.s32 %s20, %s27
      %p160 = scmp.eq.s32.totalorder %s159, 0
      %s162 = sadd.s32 %s161, 1
      %s163 = scalar_select %p160, %s161, %s162
      %p166 = pneg %p160
      %p167 = scmp.eq.s32.totalorder %s20, 1
      %p168 = por %p166, %p167
      %p169 = scmp.ne.s32.totalorder %s161, %s164
      %p170 = scmp.eq.s32.totalorder %s20, 0
      %p171 = por %p169, %p170
      %p172 = scmp.ne.s32.totalorder %s161, %s164
      %p173 = scmp.eq.s32.totalorder %s25, 1
      %p174 = por %p172, %p173
      %p175 = scmp.ne.s32.totalorder %s164, %s165
      %p176 = scmp.eq.s32.totalorder %s25, 0
      %p177 = por %p175, %p176
      %p178 = scmp.ne.s32.totalorder %s164, %s165
      %p179 = scmp.eq.s32.totalorder %s26, 1
      %p180 = por %p178, %p179
      %p182 = scmp.ne.s32.totalorder %s165, %s181
      %p183 = scmp.eq.s32.totalorder %s26, 0
      %p184 = por %p182, %p183
      %p185 = scmp.le.s32.totalorder 1, %s20
      %p186 = scmp.lt.s32.totalorder %s20, 3
      %p187 = pnand %p185, %p186
      %p188 = pneg %p187
      // Predicated region
      $region9: #{tpu_custom_call.1} parent=5 // pred_check
        _
      $region10: #{tpu_custom_call.1} parent=5 // pred_check_branch
        %190 = sbr.rel (%p187) target = $region12
      $region11: #{tpu_custom_call.1} parent=5 // pred_region
        %s191 = ssub.s32 %s20, 1
        // Predicated region
        $region13: #{tpu_custom_call.1} parent=11 // pred_check
          %p192 = pneg %p67
        $region14: #{tpu_custom_call.1} parent=11 // pred_check_branch
          %194 = sbr.rel (%p192) target = $region16
        $region15: #{tpu_custom_call.1} parent=11 // pred_region
          _
        $region16: #{tpu_custom_call.1} parent=11 // pred_fallthru
          _
        // Predicated region
        $region17: #{tpu_custom_call.1} parent=11 // pred_check
          %p195 = pneg %p88
        $region18: #{tpu_custom_call.1} parent=11 // pred_check_branch
          %197 = sbr.rel (%p195) target = $region20
        $region19: #{tpu_custom_call.1} parent=11 // pred_region
          _
        $region20: #{tpu_custom_call.1} parent=11 // pred_fallthru
          _
        // Predicated region
        $region21: #{tpu_custom_call.1} parent=11 // pred_check
          %p198 = pneg %p109
        $region22: #{tpu_custom_call.1} parent=11 // pred_check_branch
          %200 = sbr.rel (%p198) target = $region24
        $region23: #{tpu_custom_call.1} parent=11 // pred_region
          _
        $region24: #{tpu_custom_call.1} parent=11 // pred_fallthru
          _
        // Predicated region
        $region25: #{tpu_custom_call.1} parent=11 // pred_check
          %p201 = pneg %p130
        $region26: #{tpu_custom_call.1} parent=11 // pred_check_branch
          %203 = sbr.rel (%p201) target = $region28
        $region27: #{tpu_custom_call.1} parent=11 // pred_region
          _
        $region28: #{tpu_custom_call.1} parent=11 // pred_fallthru
          _
        // Predicated region
        $region29: #{tpu_custom_call.1} parent=11 // pred_check
          %p204 = pneg %p151
        $region30: #{tpu_custom_call.1} parent=11 // pred_check_branch
          %206 = sbr.rel (%p204) target = $region32
        $region31: #{tpu_custom_call.1} parent=11 // pred_region
          _
        $region32: #{tpu_custom_call.1} parent=11 // pred_fallthru
          _
      $region12: #{tpu_custom_call.1} parent=5 // pred_fallthru
        _
      %p207 = scmp.lt.s32.totalorder %s20, 2
      // Predicated region
      $region33: #{tpu_custom_call.1} parent=5 // pred_check
        %p208 = pneg %p207
      $region34: #{tpu_custom_call.1} parent=5 // pred_check_branch
        %210 = sbr.rel (%p208) target = $region36
      $region35: #{tpu_custom_call.1} parent=5 // pred_region
        // Predicated region
        $region37: #{tpu_custom_call.1} parent=35 // pred_check
          %p211 = pneg %p40
        $region38: #{tpu_custom_call.1} parent=35 // pred_check_branch
          %213 = sbr.rel (%p211) target = $region40
        $region39: #{tpu_custom_call.1} parent=35 // pred_region
          %s214 = sand.u32 %s30, 1
          %s215 = scalar_lea.sflag [#allocation4], %s214
          %s216 = sand.u32 %s30, 1
          %s217 = smul.addr %s216, 128
          %s218 = scalar_lea.vmem [#allocation3], %s217
          %s220 = ssub.s32 2048, 2048
          %221 = vsyncadd %s215, %s220
          %s222 = smul.addr %s20, 16
          %s223 = smul.addr %s222, 128
          %s224 = scalar_lea.hbm %s0, %s223
          %s225 = sshll.u32 %s218, 4
          %s226 = int_to_ptr.vmem [resolvable:$true] %s225
          %231 = dma.hbm_to_vmem [thread:$0]  %s224, 2048, %s226, %s215, 256, 256, 16
        $region40: #{tpu_custom_call.1} parent=35 // pred_fallthru
          _
      $region36: #{tpu_custom_call.1} parent=5 // pred_fallthru
        _
      %p232 = scmp.le.s32.totalorder 1, %s20
      %p233 = scmp.lt.s32.totalorder %s20, 3
      %p234 = pnand %p232, %p233
      %p235 = pneg %p234
      // Predicated region
      $region41: #{tpu_custom_call.1} parent=5 // pred_check
        _
      $region42: #{tpu_custom_call.1} parent=5 // pred_check_branch
        %237 = sbr.rel (%p234) target = $region44
      $region43: #{tpu_custom_call.1} parent=5 // pred_region
        %s238 = ssub.s32 %s20, 1
        %s239 = sand.u32 %s33, 1
        %s240 = scalar_lea.sflag [#allocation4], %s239
        %s241 = sand.u32 %s33, 1
        %s242 = smul.addr %s241, 128
        %s243 = scalar_lea.vmem [#allocation3], %s242
        // Predicated region
        $region45: #{tpu_custom_call.1} parent=43 // pred_check
          %p244 = pneg %p46
        $region46: #{tpu_custom_call.1} parent=43 // pred_check_branch
          %246 = sbr.rel (%p244) target = $region48
        $region47: #{tpu_custom_call.1} parent=43 // pred_region
          %247 = dma.done %s240, 2048
        $region48: #{tpu_custom_call.1} parent=43 // pred_fallthru
          _
        %s248 = sand.u32 %s33, 1
        %s249 = scalar_lea.sflag [#allocation4], %s248
        %s250 = sand.u32 %s33, 1
        %s251 = smul.addr %s250, 128
        %s252 = scalar_lea.vmem [#allocation3], %s251
        %p253 = pneg %p46
        %p254 = pneg %p43
        %p255 = pneg %p67
        %p256 = pneg %p64
        %p257 = pneg %p88
        %p258 = pneg %p85
        %p259 = pneg %p109
        %p260 = pneg %p106
        %p261 = pneg %p130
        %p262 = pneg %p127
        %p263 = pneg %p151
        %p264 = pneg %p148
        %p265 = pneg %p177
        %p266 = pneg %p174
        %s267 = sand.u32 %s164, 1
        %s268 = scalar_lea.sflag [#allocation5], %s267
        %s269 = sand.u32 %s164, 1
        %s270 = smul.addr %s269, 128
        %s271 = scalar_lea.vmem [#allocation6], %s270
        %v272 = vld [vmem:[%s243] sm:$0xff]
        %v273 = vld [vmem:[%s243 + $0x8] sm:$0xff]
        %v274 = vld [vmem:[%s243 + $0x10] sm:$0xff]
        %v275 = vld [vmem:[%s243 + $0x18] sm:$0xff]
        %v276 = vld [vmem:[%s243 + $0x20] sm:$0xff]
        %v277 = vld [vmem:[%s243 + $0x28] sm:$0xff]
        %v278 = vld [vmem:[%s243 + $0x30] sm:$0xff]
        %v279 = vld [vmem:[%s243 + $0x38] sm:$0xff]
        %v280 = vld [vmem:[%s243 + $0x40] sm:$0xff]
        %v281 = vld [vmem:[%s243 + $0x48] sm:$0xff]
        %v282 = vld [vmem:[%s243 + $0x50] sm:$0xff]
        %v283 = vld [vmem:[%s243 + $0x58] sm:$0xff]
        %v284 = vld [vmem:[%s243 + $0x60] sm:$0xff]
        %v285 = vld [vmem:[%s243 + $0x68] sm:$0xff]
        %v286 = vld [vmem:[%s243 + $0x70] sm:$0xff]
        %v287 = vld [vmem:[%s243 + $0x78] sm:$0xff]
        %v288 = vadd.f32 %v272, %v273
        %289 = vadd.xlane.f32.xlu0 %v288
        %v290 = vpop.xlane.xlu0 %289
        %v291 = vadd.f32 %v274, %v275
        %292 = vadd.xlane.f32.xlu0 %v291
        %v293 = vpop.xlane.xlu0 %292
        %v294 = vadd.f32 %v276, %v277
        %295 = vadd.xlane.f32.xlu0 %v294
        %v296 = vpop.xlane.xlu0 %295
        %v297 = vadd.f32 %v278, %v279
        %298 = vadd.xlane.f32.xlu0 %v297
        %v299 = vpop.xlane.xlu0 %298
        %v300 = vadd.f32 %v280, %v281
        %301 = vadd.xlane.f32.xlu0 %v300
        %v302 = vpop.xlane.xlu0 %301
        %v303 = vadd.f32 %v282, %v283
        %304 = vadd.xlane.f32.xlu0 %v303
        %v305 = vpop.xlane.xlu0 %304
        %v306 = vadd.f32 %v284, %v285
        %307 = vadd.xlane.f32.xlu0 %v306
        %v308 = vpop.xlane.xlu0 %307
        %v309 = vadd.f32 %v286, %v287
        %310 = vadd.xlane.f32.xlu0 %v309
        %v311 = vpop.xlane.xlu0 %310
        %v312 = vmul.f32 %v290, 0.00390625
        %v313 = vmul.f32 %v293, 0.00390625
        %v314 = vmul.f32 %v296, 0.00390625
        %v315 = vmul.f32 %v299, 0.00390625
        %v316 = vmul.f32 %v302, 0.00390625
        %v317 = vmul.f32 %v305, 0.00390625
        %v318 = vmul.f32 %v308, 0.00390625
        %v319 = vmul.f32 %v311, 0.00390625
        %v320 = vld [vmem:[%s1] sm:$0xff]
        %v321 = vld [vmem:[%s1 + $0x8] sm:$0xff]
        %v322 = vld [vmem:[%s1 + $0x10] sm:$0xff]
        %v323 = vld [vmem:[%s1 + $0x18] sm:$0xff]
        %v324 = vld [vmem:[%s1 + $0x20] sm:$0xff]
        %v325 = vld [vmem:[%s1 + $0x28] sm:$0xff]
        %v326 = vld [vmem:[%s1 + $0x30] sm:$0xff]
        %v327 = vld [vmem:[%s1 + $0x38] sm:$0xff]
        %v328 = vld [vmem:[%s2] sm:$0x1]
        %v337 = vlaneseq
        %v338 = vand.u32 %v337, 127
        %v339 = vlaneseq
        %v340 = vshrl.u32 %v339, 7
        %v341 = vsub.s32 %v338, %v340
        %v342 = vrot.slane %v312, %v341
        %v343 = vadd.s32 %v338, 4294967288
        %v344 = vlaneseq
        %v345 = vshrl.u32 %v344, 7
        %v346 = vsub.s32 %v343, %v345
        %v347 = vrot.slane %v313, %v346
        %vm348 = vcmask 130112
        %v349 = vsel %vm348, %v347, %v342
        %v350 = vadd.s32 %v338, 4294967280
        %v351 = vlaneseq
        %v352 = vshrl.u32 %v351, 7
        %v353 = vsub.s32 %v350, %v352
        %v354 = vrot.slane %v314, %v353
        %vm355 = vcmask 195712
        %v356 = vsel %vm355, %v354, %v349
        %v357 = vadd.s32 %v338, 4294967272
        %v358 = vlaneseq
        %v359 = vshrl.u32 %v358, 7
        %v360 = vsub.s32 %v357, %v359
        %v361 = vrot.slane %v315, %v360
        %vm362 = vcmask 261312
        %v363 = vsel %vm362, %v361, %v356
        %v364 = vadd.s32 %v338, 4294967264
        %v365 = vlaneseq
        %v366 = vshrl.u32 %v365, 7
        %v367 = vsub.s32 %v364, %v366
        %v368 = vrot.slane %v316, %v367
        %vm369 = vcmask 326912
        %v370 = vsel %vm369, %v368, %v363
        %v371 = vadd.s32 %v338, 4294967256
        %v372 = vlaneseq
        %v373 = vshrl.u32 %v372, 7
        %v374 = vsub.s32 %v371, %v373
        %v375 = vrot.slane %v317, %v374
        %vm376 = vcmask 392512
        %v377 = vsel %vm376, %v375, %v370
        %v378 = vadd.s32 %v338, 4294967248
        %v379 = vlaneseq
        %v380 = vshrl.u32 %v379, 7
        %v381 = vsub.s32 %v378, %v380
        %v382 = vrot.slane %v318, %v381
        %vm383 = vcmask 458112
        %v384 = vsel %vm383, %v382, %v377
        %v385 = vadd.s32 %v338, 4294967240
        %v386 = vlaneseq
        %v387 = vshrl.u32 %v386, 7
        %v388 = vsub.s32 %v385, %v387
        %v389 = vrot.slane %v319, %v388
        %vm390 = vcmask 523712
        %v391 = vsel %vm390, %v389, %v384
        %vm392 = vcmask 523264
        %v393 = vsel %vm392, %v391, 0
        %395 = vmatprep.subr.mxu0 0.0
        %396 = vmatpush1.msra.mxu0 0.0
        %397 = vmatprep.subr.mxu0 0.0
        %398 = vmatpush1.msra.mxu0 0.0
        %399 = vmatprep.subr.mxu0 0.0
        %400 = vmatpush1.msra.mxu0 0.0
        %401 = vmatprep.subr.mxu0 0.0
        %402 = vmatpush1.msra.mxu0 0.0
        %403 = vmatprep.subr.mxu0 0.0
        %404 = vmatpush1.msra.mxu0 0.0
        %405 = vmatprep.subr.mxu0 0.0
        %406 = vmatpush1.msra.mxu0 0.0
        %407 = vmatprep.subr.mxu0 0.0
        %408 = vmatpush1.msra.mxu0 0.0
        %409 = vmatprep.subr.mxu0 0.0
        %410 = vmatpush1.msra.mxu0 0.0
        %411 = vmatprep.subr.mxu0 0.0
        %412 = vmatpush1.msra.mxu0 %v327
        %413 = vmatprep.subr.mxu0 0.0
        %414 = vmatpush1.msra.mxu0 %v326
        %415 = vmatprep.subr.mxu0 0.0
        %416 = vmatpush1.msra.mxu0 %v325
        %417 = vmatprep.subr.mxu0 0.0
        %418 = vmatpush1.msra.mxu0 %v324
        %419 = vmatprep.subr.mxu0 0.0
        %420 = vmatpush1.msra.mxu0 %v323
        %421 = vmatprep.subr.mxu0 0.0
        %422 = vmatpush1.msra.mxu0 %v322
        %423 = vmatprep.subr.mxu0 0.0
        %424 = vmatpush1.msra.mxu0 %v321
        %425 = vmatprep.subr.mxu0 0.0
        %426 = vmatpush1.msra.mxu0 %v320
        %427 = vmatprep.subr.mxu0 0.0
        %428 = vmatpush2.msra.mxu0 0.0
        %429 = vmatprep.subr.mxu0 0.0
        %430 = vmatpush2.msra.mxu0 0.0
        %431 = vmatprep.subr.mxu0 0.0
        %432 = vmatpush2.msra.mxu0 0.0
        %433 = vmatprep.subr.mxu0 0.0
        %434 = vmatpush2.msra.mxu0 0.0
        %435 = vmatprep.subr.mxu0 0.0
        %436 = vmatpush2.msra.mxu0 0.0
        %437 = vmatprep.subr.mxu0 0.0
        %438 = vmatpush2.msra.mxu0 0.0
        %439 = vmatprep.subr.mxu0 0.0
        %440 = vmatpush2.msra.mxu0 0.0
        %441 = vmatprep.subr.mxu0 0.0
        %442 = vmatpush2.msra.mxu0 0.0
        %443 = vmatprep.subr.mxu0 0.0
        %444 = vmatpush2.msra.mxu0 0.0
        %445 = vmatprep.subr.mxu0 0.0
        %446 = vmatpush2.msra.mxu0 0.0
        %447 = vmatprep.subr.mxu0 0.0
        %448 = vmatpush2.msra.mxu0 0.0
        %449 = vmatprep.subr.mxu0 0.0
        %450 = vmatpush2.msra.mxu0 0.0
        %451 = vmatprep.subr.mxu0 0.0
        %452 = vmatpush2.msra.mxu0 0.0
        %453 = vmatprep.subr.mxu0 0.0
        %454 = vmatpush2.msra.mxu0 0.0
        %455 = vmatprep.subr.mxu0 0.0
        %456 = vmatpush2.msra.mxu0 0.0
        %457 = vmatprep.subr.mxu0 0.0
        %458 = vmatpush2.msra.mxu0 0.0
        %459 = vmatprep.mubr.f32.mxu0 0.0
        %460 = vmatmul.mubr.f32.gmra.mxu0 %v393
        %v461 = vpop.f32.mrf.mxu0
        %v462 = vadd.f32 %v328, %v461
        %v463 = vpop.f32.mrf.mxu0
        %464 = vdwg.mxu0
        %v465 = vmax.f32 %v462, 0.0
        %v466 = vld [vmem:[#allocation2] sm:$0x1]
        %v467 = vmin.f32 %v462, 0.0
        %469 = vset.pattern.permute.xlu0 0
        %470 = vperm.xlu0 %469, %v466
        %v471 = vpop.permute.xlu0 %470
        %v473 = vlaneseq
        %v474 = vshrl.u32 %v473, 7
        %v475 = vsub.s32 0, %v474
        %v476 = vrot.slane %v471, %v475
        %v477 = vmul.f32 %v476, %v467
        %v478 = vadd.f32 %v465, %v477
        %v479 = vld [vmem:[%s4] sm:$0xf]
        %v480 = vld [vmem:[%s5] sm:$0x1]
        %vm481 = vcmask 31744
        %v483 = vsel %vm481, %v478, 0
        %vm485 = vcmask 1043456
        %v487 = vsel %vm485, %v479, 0
        %489 = vmatprep.subr.mxu0 0.0
        %490 = vmatpush1.msra.mxu0 0.0
        %491 = vmatprep.subr.mxu0 0.0
        %492 = vmatpush1.msra.mxu0 0.0
        %493 = vmatprep.subr.mxu0 0.0
        %494 = vmatpush1.msra.mxu0 0.0
        %495 = vmatprep.subr.mxu0 0.0
        %496 = vmatpush1.msra.mxu0 0.0
        %497 = vmatprep.subr.mxu0 0.0
        %498 = vmatpush1.msra.mxu0 0.0
        %499 = vmatprep.subr.mxu0 0.0
        %500 = vmatpush1.msra.mxu0 0.0
        %501 = vmatprep.subr.mxu0 0.0
        %502 = vmatpush1.msra.mxu0 0.0
        %503 = vmatprep.subr.mxu0 0.0
        %504 = vmatpush1.msra.mxu0 0.0
        %505 = vmatprep.subr.mxu0 0.0
        %506 = vmatpush1.msra.mxu0 0.0
        %507 = vmatprep.subr.mxu0 0.0
        %508 = vmatpush1.msra.mxu0 0.0
        %509 = vmatprep.subr.mxu0 0.0
        %510 = vmatpush1.msra.mxu0 0.0
        %511 = vmatprep.subr.mxu0 0.0
        %512 = vmatpush1.msra.mxu0 0.0
        %513 = vmatprep.subr.mxu0 0.0
        %514 = vmatpush1.msra.mxu0 0.0
        %515 = vmatprep.subr.mxu0 0.0
        %516 = vmatpush1.msra.mxu0 0.0
        %517 = vmatprep.subr.mxu0 0.0
        %518 = vmatpush1.msra.mxu0 0.0
        %519 = vmatprep.subr.mxu0 0.0
        %520 = vmatpush1.msra.mxu0 %v487
        %521 = vmatprep.subr.mxu0 0.0
        %522 = vmatpush2.msra.mxu0 0.0
        %523 = vmatprep.subr.mxu0 0.0
        %524 = vmatpush2.msra.mxu0 0.0
        %525 = vmatprep.subr.mxu0 0.0
        %526 = vmatpush2.msra.mxu0 0.0
        %527 = vmatprep.subr.mxu0 0.0
        %528 = vmatpush2.msra.mxu0 0.0
        %529 = vmatprep.subr.mxu0 0.0
        %530 = vmatpush2.msra.mxu0 0.0
        %531 = vmatprep.subr.mxu0 0.0
        %532 = vmatpush2.msra.mxu0 0.0
        %533 = vmatprep.subr.mxu0 0.0
        %534 = vmatpush2.msra.mxu0 0.0
        %535 = vmatprep.subr.mxu0 0.0
        %536 = vmatpush2.msra.mxu0 0.0
        %537 = vmatprep.subr.mxu0 0.0
        %538 = vmatpush2.msra.mxu0 0.0
        %539 = vmatprep.subr.mxu0 0.0
        %540 = vmatpush2.msra.mxu0 0.0
        %541 = vmatprep.subr.mxu0 0.0
        %542 = vmatpush2.msra.mxu0 0.0
        %543 = vmatprep.subr.mxu0 0.0
        %544 = vmatpush2.msra.mxu0 0.0
        %545 = vmatprep.subr.mxu0 0.0
        %546 = vmatpush2.msra.mxu0 0.0
        %547 = vmatprep.subr.mxu0 0.0
        %548 = vmatpush2.msra.mxu0 0.0
        %549 = vmatprep.subr.mxu0 0.0
        %550 = vmatpush2.msra.mxu0 0.0
        %551 = vmatprep.subr.mxu0 0.0
        %552 = vmatpush2.msra.mxu0 0.0
        %553 = vmatprep.mubr.f32.mxu0 0.0
        %554 = vmatmul.mubr.f32.gmra.mxu0 %v483
        %v555 = vpop.f32.mrf.mxu0
        %v556 = vadd.f32 %v480, %v555
        %v557 = vpop.f32.mrf.mxu0
        %558 = vdwg.mxu0
        %v559 = vsub.f32 0.0, %v556
        %v560 = vmul.f32 %v559, 1.442695
        %v561 = vpow.pop %v560
        %v562 = vadd.f32 %v561, 1.0
        %v563 = vrcp.pop %v562
        %v564 = vmul.f32 1.0, %v563
        %v565 = vlaneseq
        %v566 = vshrl.u32 %v565, 7
        %v567 = vsub.s32 0, %v566
        %v568 = vrot.slane %v564, %v567
        %570 = vbcast.lane.b32.xlu0 %v568, 256
        %v571 = vpop.permute.xlu0 %570
        %s573 = sor.u32 256, 8
        %574 = vbcast.lane.b32.xlu0 %v568, %s573
        %v575 = vpop.permute.xlu0 %574
        %s577 = sor.u32 256, 16
        %578 = vbcast.lane.b32.xlu0 %v568, %s577
        %v579 = vpop.permute.xlu0 %578
        %s581 = sor.u32 256, 24
        %582 = vbcast.lane.b32.xlu0 %v568, %s581
        %v583 = vpop.permute.xlu0 %582
        %s585 = sor.u32 256, 32
        %586 = vbcast.lane.b32.xlu0 %v568, %s585
        %v587 = vpop.permute.xlu0 %586
        %s589 = sor.u32 256, 40
        %590 = vbcast.lane.b32.xlu0 %v568, %s589
        %v591 = vpop.permute.xlu0 %590
        %s593 = sor.u32 256, 48
        %594 = vbcast.lane.b32.xlu0 %v568, %s593
        %v595 = vpop.permute.xlu0 %594
        %s597 = sor.u32 256, 56
        %598 = vbcast.lane.b32.xlu0 %v568, %s597
        %v599 = vpop.permute.xlu0 %598
        %v600 = vmul.f32 %v272, %v571
        %v601 = vmul.f32 %v273, %v571
        %v602 = vmul.f32 %v274, %v575
        %v603 = vmul.f32 %v275, %v575
        %v604 = vmul.f32 %v276, %v579
        %v605 = vmul.f32 %v277, %v579
        %v606 = vmul.f32 %v278, %v583
        %v607 = vmul.f32 %v279, %v583
        %v608 = vmul.f32 %v280, %v587
        %v609 = vmul.f32 %v281, %v587
        %v610 = vmul.f32 %v282, %v591
        %v611 = vmul.f32 %v283, %v591
        %v612 = vmul.f32 %v284, %v595
        %v613 = vmul.f32 %v285, %v595
        %v614 = vmul.f32 %v286, %v599
        %v615 = vmul.f32 %v287, %v599
        %616 = vst [vmem:[%s271] sm:$0xff] %v600
        %617 = vst [vmem:[%s271 + $0x8] sm:$0xff] %v601
        %618 = vst [vmem:[%s271 + $0x10] sm:$0xff] %v602
        %619 = vst [vmem:[%s271 + $0x18] sm:$0xff] %v603
        %620 = vst [vmem:[%s271 + $0x20] sm:$0xff] %v604
        %621 = vst [vmem:[%s271 + $0x28] sm:$0xff] %v605
        %622 = vst [vmem:[%s271 + $0x30] sm:$0xff] %v606
        %623 = vst [vmem:[%s271 + $0x38] sm:$0xff] %v607
        %624 = vst [vmem:[%s271 + $0x40] sm:$0xff] %v608
        %625 = vst [vmem:[%s271 + $0x48] sm:$0xff] %v609
        %626 = vst [vmem:[%s271 + $0x50] sm:$0xff] %v610
        %627 = vst [vmem:[%s271 + $0x58] sm:$0xff] %v611
        %628 = vst [vmem:[%s271 + $0x60] sm:$0xff] %v612
        %629 = vst [vmem:[%s271 + $0x68] sm:$0xff] %v613
        %630 = vst [vmem:[%s271 + $0x70] sm:$0xff] %v614
        %631 = vst [vmem:[%s271 + $0x78] sm:$0xff] %v615
        %s632 = sand.u32 %s164, 1
        %s633 = scalar_lea.sflag [#allocation5], %s632
        %s634 = sand.u32 %s164, 1
        %s635 = smul.addr %s634, 128
        %s636 = scalar_lea.vmem [#allocation6], %s635
        // Predicated region
        $region49: #{tpu_custom_call.1} parent=43 // pred_check
          %p637 = pneg %p174
        $region50: #{tpu_custom_call.1} parent=43 // pred_check_branch
          %639 = sbr.rel (%p637) target = $region52
        $region51: #{tpu_custom_call.1} parent=43 // pred_region
          %s641 = ssub.s32 2048, 2048
          %642 = vsyncadd %s633, %s641
          %s643 = smul.addr %s25, 16
          %s644 = smul.addr %s643, 128
          %s645 = scalar_lea.hbm %s6, %s644
          %s646 = sshll.u32 %s636, 4
          %s647 = int_to_ptr.vmem [resolvable:$true] %s646
          %652 = dma.vmem_to_hbm [thread:$0]  %s647, 2048, %s645, %s633, 256, 256, 16
        $region52: #{tpu_custom_call.1} parent=43 // pred_fallthru
          _
      $region44: #{tpu_custom_call.1} parent=5 // pred_fallthru
        _
      %p653 = scmp.le.s32.totalorder 2, %s20
      // Predicated region
      $region53: #{tpu_custom_call.1} parent=5 // pred_check
        %p654 = pneg %p653
      $region54: #{tpu_custom_call.1} parent=5 // pred_check_branch
        %656 = sbr.rel (%p654) target = $region56
      $region55: #{tpu_custom_call.1} parent=5 // pred_region
        %s657 = ssub.s32 %s20, 2
        // Predicated region
        $region57: #{tpu_custom_call.1} parent=55 // pred_check
          %p658 = pneg %p180
        $region58: #{tpu_custom_call.1} parent=55 // pred_check_branch
          %660 = sbr.rel (%p658) target = $region60
        $region59: #{tpu_custom_call.1} parent=55 // pred_region
          %s661 = sand.u32 %s165, 1
          %s662 = scalar_lea.sflag [#allocation5], %s661
          %s663 = sand.u32 %s165, 1
          %s664 = smul.addr %s663, 128
          %s665 = scalar_lea.vmem [#allocation6], %s664
          %666 = dma.done %s662, 2048
        $region60: #{tpu_custom_call.1} parent=55 // pred_fallthru
          _
      $region56: #{tpu_custom_call.1} parent=5 // pred_fallthru
        _
    $region6: #{tpu_custom_call.1} parent=1 // loop_footer
      %s24 = sadd.s32 1, %s20
    $region7: #{tpu_custom_call.1} parent=1 // loop_footer_branch
      %19 = sbr.rel target = $region3
    $region8: #{tpu_custom_call.1} parent=1 // loop_exit
      _
    %667 = vsyncpa [#allocation4], 1
    %s668 = scalar_lea.sflag [#allocation4], 1
    %669 = vsyncpa %s668, 1
    %670 = vsyncpa [#allocation5], 1
    %s671 = scalar_lea.sflag [#allocation5], 1
    %672 = vsyncpa %s671, 1

</llo_original>
